<compile_context>
chip_gen: v5e
topology: v5e:2x2
jax: 0.10.0
libtpu: 0.0.40
codegen_flags: <defaults>
</compile_context>

<pallas_src>
import jax
import jax.numpy as jnp
from jax.experimental import pallas as pl
from jax.experimental.pallas import tpu as pltpu

# Module hyper-parameters (small, synthetic)
N_PRED = 4        # n_pred_chans
N_STATIC = 2      # n_static_channels
N_DYNAMIC = 3     # n_dynamic_channels
INP_CHANS = 2 * N_PRED + N_DYNAMIC + N_STATIC + 1   # = 14 (13 data channels + s)
N_DATA_CHANS = INP_CHANS - 1                         # = 13


def _interp_kernel(x0_ref, x_ref, xu_ref, st_ref, w_ref, beff_ref, o_ref):
    """Fused channel-concat + 1x1 conv on one lane-dense (C, tile_n) slab.

    out[o, n] = sum_c W[o, c] * in[c, n] + beff[o]
    where `in` is the virtual concat [x0, x, xu, static] and `beff` already
    folds the bias and the s-channel contribution (per batch element).

    Pure VPU: 13 scalar-broadcast MACs per output channel (f32 accumulation),
    no MXU traffic and no materialized concat -> compute hides under the HBM
    DMA of the activation blocks.
    """
    w = w_ref[...].astype(jnp.float32)          # (N_PRED, 13)
    acc = beff_ref[...].astype(jnp.float32)     # (N_PRED, 1) -> lane-broadcasts
    ch = 0
    for src in (x0_ref, x_ref, xu_ref, st_ref):
        a = src[...].astype(jnp.float32)        # (C, tile_n)
        for c in range(a.shape[0]):
            # (N_PRED,1) weight column * (1,tile_n) input row -> (N_PRED,tile_n)
            acc = acc + w[:, ch:ch + 1] * a[c:c + 1, :]
            ch += 1
    o_ref[...] = acc.astype(o_ref.dtype)


def _chip_tiling():
    """Per-generation lane-tile size and VMEM budget."""
    try:
        kind = jax.devices()[0].device_kind.lower()
    except Exception:  # pragma: no cover - defensive
        kind = ""
    if "v7" in kind:
        # v7x: 64 MiB physical VMEM per TensorCore -> cap tile, modest limit.
        return 65536, 48 * 1024 * 1024, True
    if "v6" in kind or "v5" in kind:
        # v5e/v6e: 128 MiB VMEM -> big tiles amortize ~0.35us per-step overhead.
        return 131072, 80 * 1024 * 1024, False
    # Unknown / older generations: conservative defaults.
    return 32768, 32 * 1024 * 1024, False


def interpolation_forward(x0, x, xu, static, s, weight, bias, *,
                          target_lanes=None, vmem_limit_bytes=None):
    """Forward pass of InterpolationWrapper with a 1x1-conv model.

    x0, x:   (B, N_PRED, H, W)      NCHW
    xu:      (B, N_DYNAMIC, H, W)   NCHW
    static:  (B, N_STATIC, H, W)    NCHW
    s:       (B,)
    weight:  (INP_CHANS, N_PRED)    (Cin, Cout) of the 1x1 conv
    bias:    (N_PRED,)
    returns: (B, N_PRED, H, W)      NCHW
    """
    B, _, H, W = x.shape
    HW = H * W
    out_dtype = x.dtype

    auto_lanes, auto_vmem, two_cores = _chip_tiling()
    if target_lanes is None:
        target_lanes = auto_lanes
    if vmem_limit_bytes is None:
        vmem_limit_bytes = auto_vmem

    # Free reshapes (no transpose, same HBM layout): spatial becomes the lane axis.
    x0_r = x0.reshape(B, N_PRED, HW)
    x_r = x.reshape(B, N_PRED, HW)
    xu_r = xu.reshape(B, N_DYNAMIC, HW)
    st_r = static.reshape(B, N_STATIC, HW)

    # Tiny parameter prep (B*4 + 52 floats): drop the s-column from W and fold
    # it with the bias into a per-(batch, out-channel) effective bias.
    w13 = jnp.transpose(weight[:N_DATA_CHANS, :]).astype(jnp.float32)        # (N_PRED, 13)
    s_col = weight[N_DATA_CHANS, :].astype(jnp.float32)                       # (N_PRED,)
    beff = (s.astype(jnp.float32)[:, None] * s_col[None, :]
            + bias.astype(jnp.float32)[None, :])                              # (B, N_PRED)
    beff = beff.reshape(B, N_PRED, 1)

    # Lane tile: as large as the chip's VMEM budget allows (multiple of 128);
    # ragged tails via cdiv grid + Pallas boundary clipping (safe: lane-wise map).
    if HW <= target_lanes:
        tile_n = HW               # full spatial extent is always a legal block dim
    else:
        tile_n = (target_lanes // 128) * 128
    grid_n = pl.cdiv(HW, tile_n)

    # v7x has 2 TensorCores sharing parallel grid axes: avoid a single-step grid.
    if two_cores and B * grid_n < 2 and HW >= 256:
        tile_n = max(128, ((pl.cdiv(HW, 2) + 127) // 128) * 128)
        grid_n = pl.cdiv(HW, tile_n)

    def inp_spec(c):
        return pl.BlockSpec((None, c, tile_n), lambda b, j: (b, 0, j))

    grid_spec = pltpu.PrefetchScalarGridSpec(
        num_scalar_prefetch=0,
        grid=(B, grid_n),
        in_specs=[
            inp_spec(N_PRED),                                           # x0
            inp_spec(N_PRED),                                           # x
            inp_spec(N_DYNAMIC),                                        # xu
            inp_spec(N_STATIC),                                         # static
            pl.BlockSpec((N_PRED, N_DATA_CHANS), lambda b, j: (0, 0)),  # W^T (no s col)
            pl.BlockSpec((None, N_PRED, 1), lambda b, j: (b, 0, 0)),    # effective bias
        ],
        out_specs=pl.BlockSpec((None, N_PRED, tile_n), lambda b, j: (b, 0, j)),
    )

    out_flat = pl.pallas_call(
        _interp_kernel,
        out_shape=jax.ShapeDtypeStruct((B, N_PRED, HW), out_dtype),
        grid_spec=grid_spec,
        compiler_params=pltpu.CompilerParams(
            dimension_semantics=("parallel", "parallel"),
            vmem_limit_bytes=vmem_limit_bytes,
        ),
    )(x0_r, x_r, xu_r, st_r, w13, beff)

    # Free reshape back to NCHW (no transpose needed).
    return out_flat.reshape(B, N_PRED, H, W)


def _reference_forward(x0, x, xu, static, s, weight, bias):
    """Pure-JAX reference mirroring the PyTorch forward exactly."""
    B, _, H, W = x.shape
    s_full = jnp.broadcast_to(s.reshape(B, 1, 1, 1), (B, 1, H, W))
    x_in = jnp.concatenate([x0, x, xu, static, s_full], axis=-3)  # dim=-3 == C
    return jnp.einsum("bchw,co->bohw", x_in, weight) + bias.reshape(1, -1, 1, 1)


def _make_inputs(key, B, H, W):
    kx0, kx, kxu, kst, ks = jax.random.split(key, 5)
    x0 = jax.random.normal(kx0, (B, N_PRED, H, W), dtype=jnp.float32)
    x = jax.random.normal(kx, (B, N_PRED, H, W), dtype=jnp.float32)
    xu = jax.random.normal(kxu, (B, N_DYNAMIC, H, W), dtype=jnp.float32)
    static = jax.random.normal(kst, (B, N_STATIC, H, W), dtype=jnp.float32)
    s = jax.random.uniform(ks, (B,), dtype=jnp.float32)
    return x0, x, xu, static, s


if __name__ == "__main__":
    key = jax.random.PRNGKey(0)
    kin1, kin2, kw, kb = jax.random.split(key, 4)

    # Deterministic synthetic model parameters (1x1 conv: Cin -> Cout).
    weight = jax.random.normal(kw, (INP_CHANS, N_PRED), dtype=jnp.float32) * 0.1
    bias = jax.random.normal(kb, (N_PRED,), dtype=jnp.float32) * 0.1

    # Case 1: single spatial tile per batch element (B=2, 16x16).
    x0, x, xu, static, s = _make_inputs(kin1, 2, 16, 16)
    out = jax.block_until_ready(
        interpolation_forward(x0, x, xu, static, s, weight, bias))
    ref = _reference_forward(x0, x, xu, static, s, weight, bias)
    assert out.shape == (2, N_PRED, 16, 16)
    assert jnp.allclose(out, ref, atol=1e-5, rtol=1e-5), "mismatch (single tile)"

    # Case 2: multi-tile spatial grid with a ragged tail (HW=400, tile=256),
    # exercising the boundary-clipping path flagged in the review.
    x0, x, xu, static, s = _make_inputs(kin2, 2, 20, 20)
    out2 = jax.block_until_ready(
        interpolation_forward(x0, x, xu, static, s, weight, bias,
                              target_lanes=256))
    ref2 = _reference_forward(x0, x, xu, static, s, weight, bias)
    assert out2.shape == (2, N_PRED, 20, 20)
    assert jnp.allclose(out2, ref2, atol=1e-5, rtol=1e-5), "mismatch (ragged tiles)"

    print("KERNEL_OK")
</pallas_src>

<mosaic_0001>
module attributes {stable_mosaic.version = 11 : i64} {
  func.func @_interp_kernel(%arg0: i32, %arg1: i32, %arg2: memref<1x4x256xf32, #tpu.memory_space<vmem>>, %arg3: memref<1x4x256xf32, #tpu.memory_space<vmem>>, %arg4: memref<1x3x256xf32, #tpu.memory_space<vmem>>, %arg5: memref<1x2x256xf32, #tpu.memory_space<vmem>>, %arg6: memref<4x13xf32, #tpu.memory_space<vmem>>, %arg7: memref<1x4x1xf32, #tpu.memory_space<vmem>>, %arg8: memref<1x4x256xf32, #tpu.memory_space<vmem>>) attributes {dimension_semantics = [#tpu.dimension_semantics<parallel>, #tpu.dimension_semantics<parallel>], iteration_bounds = array<i64: 2, 1>, scalar_prefetch = 0 : i64, scratch_operands = 0 : i64, tpu.core_type = #tpu.core_type<tc>, window_params = [{transform_indices = @transform_0, window_bounds = array<i64: 1, 4, 256>}, {transform_indices = @transform_1, window_bounds = array<i64: 1, 4, 256>}, {transform_indices = @transform_2, window_bounds = array<i64: 1, 3, 256>}, {transform_indices = @transform_3, window_bounds = array<i64: 1, 2, 256>}, {pipeline_mode = #tpu.pipeline_mode<synchronous>, transform_indices = @transform_4, window_bounds = array<i64: 4, 13>}, {transform_indices = @transform_5, window_bounds = array<i64: 1, 4, 1>}, {transform_indices = @transform_6, window_bounds = array<i64: 1, 4, 256>}]} {
    %c0 = arith.constant 0 : index
    %c0_0 = arith.constant 0 : index
    %0 = vector.load %arg6[%c0, %c0_0] : memref<4x13xf32, #tpu.memory_space<vmem>>, vector<4x13xf32>
    %c0_1 = arith.constant 0 : index
    %c0_2 = arith.constant 0 : index
    %c0_3 = arith.constant 0 : index
    %1 = vector.load %arg7[%c0_1, %c0_2, %c0_3] : memref<1x4x1xf32, #tpu.memory_space<vmem>>, vector<1x4x1xf32>
    %2 = vector.shape_cast %1 : vector<1x4x1xf32> to vector<4x1xf32>
    %c0_4 = arith.constant 0 : index
    %c0_5 = arith.constant 0 : index
    %c0_6 = arith.constant 0 : index
    %3 = vector.load %arg2[%c0_4, %c0_5, %c0_6] : memref<1x4x256xf32, #tpu.memory_space<vmem>>, vector<1x4x256xf32>
    %4 = vector.shape_cast %3 : vector<1x4x256xf32> to vector<4x256xf32>
    %5 = vector.extract_strided_slice %0 {offsets = [0, 0], sizes = [4, 1], strides = [1, 1]} : vector<4x13xf32> to vector<4x1xf32>
    %6 = vector.extract_strided_slice %4 {offsets = [0, 0], sizes = [1, 256], strides = [1, 1]} : vector<4x256xf32> to vector<1x256xf32>
    %7 = vector.broadcast %5 : vector<4x1xf32> to vector<4x256xf32>
    %8 = vector.broadcast %6 : vector<1x256xf32> to vector<4x256xf32>
    %9 = arith.mulf %7, %8 : vector<4x256xf32>
    %10 = vector.broadcast %2 : vector<4x1xf32> to vector<4x256xf32>
    %11 = arith.addf %10, %9 : vector<4x256xf32>
    %12 = vector.extract_strided_slice %0 {offsets = [0, 1], sizes = [4, 1], strides = [1, 1]} : vector<4x13xf32> to vector<4x1xf32>
    %13 = vector.extract_strided_slice %4 {offsets = [1, 0], sizes = [1, 256], strides = [1, 1]} : vector<4x256xf32> to vector<1x256xf32>
    %14 = vector.broadcast %12 : vector<4x1xf32> to vector<4x256xf32>
    %15 = vector.broadcast %13 : vector<1x256xf32> to vector<4x256xf32>
    %16 = arith.mulf %14, %15 : vector<4x256xf32>
    %17 = arith.addf %11, %16 : vector<4x256xf32>
    %18 = vector.extract_strided_slice %0 {offsets = [0, 2], sizes = [4, 1], strides = [1, 1]} : vector<4x13xf32> to vector<4x1xf32>
    %19 = vector.extract_strided_slice %4 {offsets = [2, 0], sizes = [1, 256], strides = [1, 1]} : vector<4x256xf32> to vector<1x256xf32>
    %20 = vector.broadcast %18 : vector<4x1xf32> to vector<4x256xf32>
    %21 = vector.broadcast %19 : vector<1x256xf32> to vector<4x256xf32>
    %22 = arith.mulf %20, %21 : vector<4x256xf32>
    %23 = arith.addf %17, %22 : vector<4x256xf32>
    %24 = vector.extract_strided_slice %0 {offsets = [0, 3], sizes = [4, 1], strides = [1, 1]} : vector<4x13xf32> to vector<4x1xf32>
    %25 = vector.extract_strided_slice %4 {offsets = [3, 0], sizes = [1, 256], strides = [1, 1]} : vector<4x256xf32> to vector<1x256xf32>
    %26 = vector.broadcast %24 : vector<4x1xf32> to vector<4x256xf32>
    %27 = vector.broadcast %25 : vector<1x256xf32> to vector<4x256xf32>
    %28 = arith.mulf %26, %27 : vector<4x256xf32>
    %29 = arith.addf %23, %28 : vector<4x256xf32>
    %c0_7 = arith.constant 0 : index
    %c0_8 = arith.constant 0 : index
    %c0_9 = arith.constant 0 : index
    %30 = vector.load %arg3[%c0_7, %c0_8, %c0_9] : memref<1x4x256xf32, #tpu.memory_space<vmem>>, vector<1x4x256xf32>
    %31 = vector.shape_cast %30 : vector<1x4x256xf32> to vector<4x256xf32>
    %32 = vector.extract_strided_slice %0 {offsets = [0, 4], sizes = [4, 1], strides = [1, 1]} : vector<4x13xf32> to vector<4x1xf32>
    %33 = vector.extract_strided_slice %31 {offsets = [0, 0], sizes = [1, 256], strides = [1, 1]} : vector<4x256xf32> to vector<1x256xf32>
    %34 = vector.broadcast %32 : vector<4x1xf32> to vector<4x256xf32>
    %35 = vector.broadcast %33 : vector<1x256xf32> to vector<4x256xf32>
    %36 = arith.mulf %34, %35 : vector<4x256xf32>
    %37 = arith.addf %29, %36 : vector<4x256xf32>
    %38 = vector.extract_strided_slice %0 {offsets = [0, 5], sizes = [4, 1], strides = [1, 1]} : vector<4x13xf32> to vector<4x1xf32>
    %39 = vector.extract_strided_slice %31 {offsets = [1, 0], sizes = [1, 256], strides = [1, 1]} : vector<4x256xf32> to vector<1x256xf32>
    %40 = vector.broadcast %38 : vector<4x1xf32> to vector<4x256xf32>
    %41 = vector.broadcast %39 : vector<1x256xf32> to vector<4x256xf32>
    %42 = arith.mulf %40, %41 : vector<4x256xf32>
    %43 = arith.addf %37, %42 : vector<4x256xf32>
    %44 = vector.extract_strided_slice %0 {offsets = [0, 6], sizes = [4, 1], strides = [1, 1]} : vector<4x13xf32> to vector<4x1xf32>
    %45 = vector.extract_strided_slice %31 {offsets = [2, 0], sizes = [1, 256], strides = [1, 1]} : vector<4x256xf32> to vector<1x256xf32>
    %46 = vector.broadcast %44 : vector<4x1xf32> to vector<4x256xf32>
    %47 = vector.broadcast %45 : vector<1x256xf32> to vector<4x256xf32>
    %48 = arith.mulf %46, %47 : vector<4x256xf32>
    %49 = arith.addf %43, %48 : vector<4x256xf32>
    %50 = vector.extract_strided_slice %0 {offsets = [0, 7], sizes = [4, 1], strides = [1, 1]} : vector<4x13xf32> to vector<4x1xf32>
    %51 = vector.extract_strided_slice %31 {offsets = [3, 0], sizes = [1, 256], strides = [1, 1]} : vector<4x256xf32> to vector<1x256xf32>
    %52 = vector.broadcast %50 : vector<4x1xf32> to vector<4x256xf32>
    %53 = vector.broadcast %51 : vector<1x256xf32> to vector<4x256xf32>
    %54 = arith.mulf %52, %53 : vector<4x256xf32>
    %55 = arith.addf %49, %54 : vector<4x256xf32>
    %c0_10 = arith.constant 0 : index
    %c0_11 = arith.constant 0 : index
    %c0_12 = arith.constant 0 : index
    %56 = vector.load %arg4[%c0_10, %c0_11, %c0_12] : memref<1x3x256xf32, #tpu.memory_space<vmem>>, vector<1x3x256xf32>
    %57 = vector.shape_cast %56 : vector<1x3x256xf32> to vector<3x256xf32>
    %58 = vector.extract_strided_slice %0 {offsets = [0, 8], sizes = [4, 1], strides = [1, 1]} : vector<4x13xf32> to vector<4x1xf32>
    %59 = vector.extract_strided_slice %57 {offsets = [0, 0], sizes = [1, 256], strides = [1, 1]} : vector<3x256xf32> to vector<1x256xf32>
    %60 = vector.broadcast %58 : vector<4x1xf32> to vector<4x256xf32>
    %61 = vector.broadcast %59 : vector<1x256xf32> to vector<4x256xf32>
    %62 = arith.mulf %60, %61 : vector<4x256xf32>
    %63 = arith.addf %55, %62 : vector<4x256xf32>
    %64 = vector.extract_strided_slice %0 {offsets = [0, 9], sizes = [4, 1], strides = [1, 1]} : vector<4x13xf32> to vector<4x1xf32>
    %65 = vector.extract_strided_slice %57 {offsets = [1, 0], sizes = [1, 256], strides = [1, 1]} : vector<3x256xf32> to vector<1x256xf32>
    %66 = vector.broadcast %64 : vector<4x1xf32> to vector<4x256xf32>
    %67 = vector.broadcast %65 : vector<1x256xf32> to vector<4x256xf32>
    %68 = arith.mulf %66, %67 : vector<4x256xf32>
    %69 = arith.addf %63, %68 : vector<4x256xf32>
    %70 = vector.extract_strided_slice %0 {offsets = [0, 10], sizes = [4, 1], strides = [1, 1]} : vector<4x13xf32> to vector<4x1xf32>
    %71 = vector.extract_strided_slice %57 {offsets = [2, 0], sizes = [1, 256], strides = [1, 1]} : vector<3x256xf32> to vector<1x256xf32>
    %72 = vector.broadcast %70 : vector<4x1xf32> to vector<4x256xf32>
    %73 = vector.broadcast %71 : vector<1x256xf32> to vector<4x256xf32>
    %74 = arith.mulf %72, %73 : vector<4x256xf32>
    %75 = arith.addf %69, %74 : vector<4x256xf32>
    %c0_13 = arith.constant 0 : index
    %c0_14 = arith.constant 0 : index
    %c0_15 = arith.constant 0 : index
    %76 = vector.load %arg5[%c0_13, %c0_14, %c0_15] : memref<1x2x256xf32, #tpu.memory_space<vmem>>, vector<1x2x256xf32>
    %77 = vector.shape_cast %76 : vector<1x2x256xf32> to vector<2x256xf32>
    %78 = vector.extract_strided_slice %0 {offsets = [0, 11], sizes = [4, 1], strides = [1, 1]} : vector<4x13xf32> to vector<4x1xf32>
    %79 = vector.extract_strided_slice %77 {offsets = [0, 0], sizes = [1, 256], strides = [1, 1]} : vector<2x256xf32> to vector<1x256xf32>
    %80 = vector.broadcast %78 : vector<4x1xf32> to vector<4x256xf32>
    %81 = vector.broadcast %79 : vector<1x256xf32> to vector<4x256xf32>
    %82 = arith.mulf %80, %81 : vector<4x256xf32>
    %83 = arith.addf %75, %82 : vector<4x256xf32>
    %84 = vector.extract_strided_slice %0 {offsets = [0, 12], sizes = [4, 1], strides = [1, 1]} : vector<4x13xf32> to vector<4x1xf32>
    %85 = vector.extract_strided_slice %77 {offsets = [1, 0], sizes = [1, 256], strides = [1, 1]} : vector<2x256xf32> to vector<1x256xf32>
    %86 = vector.broadcast %84 : vector<4x1xf32> to vector<4x256xf32>
    %87 = vector.broadcast %85 : vector<1x256xf32> to vector<4x256xf32>
    %88 = arith.mulf %86, %87 : vector<4x256xf32>
    %89 = arith.addf %83, %88 : vector<4x256xf32>
    %c0_16 = arith.constant 0 : index
    %c0_17 = arith.constant 0 : index
    %c0_18 = arith.constant 0 : index
    %90 = vector.load %arg8[%c0_16, %c0_17, %c0_18] : memref<1x4x256xf32, #tpu.memory_space<vmem>>, vector<1x4x256xf32>
    %91 = vector.shape_cast %90 : vector<1x4x256xf32> to vector<4x256xf32>
    %92 = vector.shape_cast %89 : vector<4x256xf32> to vector<1x4x256xf32>
    tpu.vector_store %arg8[%c0_16, %c0_17, %c0_18], %92 {strides = array<i32>} : memref<1x4x256xf32, #tpu.memory_space<vmem>>, vector<1x4x256xf32>,
    return
  }
  func.func @transform_0(%arg0: i32, %arg1: i32) -> (i32, i32, i32) {
    %c0_i32 = arith.constant 0 : i32
    %c0_i32_0 = arith.constant 0 : i32
    return %arg0, %c0_i32, %arg1 : i32, i32, i32
  }
  func.func @transform_1(%arg0: i32, %arg1: i32) -> (i32, i32, i32) {
    %c0_i32 = arith.constant 0 : i32
    %c0_i32_0 = arith.constant 0 : i32
    return %arg0, %c0_i32, %arg1 : i32, i32, i32
  }
  func.func @transform_2(%arg0: i32, %arg1: i32) -> (i32, i32, i32) {
    %c0_i32 = arith.constant 0 : i32
    %c0_i32_0 = arith.constant 0 : i32
    return %arg0, %c0_i32, %arg1 : i32, i32, i32
  }
  func.func @transform_3(%arg0: i32, %arg1: i32) -> (i32, i32, i32) {
    %c0_i32 = arith.constant 0 : i32
    %c0_i32_0 = arith.constant 0 : i32
    return %arg0, %c0_i32, %arg1 : i32, i32, i32
  }
  func.func @transform_4(%arg0: i32, %arg1: i32) -> (i32, i32) {
    %c0_i32 = arith.constant 0 : i32
    %c0_i32_0 = arith.constant 0 : i32
    %c0_i32_1 = arith.constant 0 : i32
    return %c0_i32, %c0_i32_0 : i32, i32
  }
  func.func @transform_5(%arg0: i32, %arg1: i32) -> (i32, i32, i32) {
    %c0_i32 = arith.constant 0 : i32
    %c0_i32_0 = arith.constant 0 : i32
    %c0_i32_1 = arith.constant 0 : i32
    return %arg0, %c0_i32, %c0_i32_0 : i32, i32, i32
  }
  func.func @transform_6(%arg0: i32, %arg1: i32) -> (i32, i32, i32) {
    %c0_i32 = arith.constant 0 : i32
    %c0_i32_0 = arith.constant 0 : i32
    return %arg0, %c0_i32, %arg1 : i32, i32, i32
  }
}

</mosaic_0001>

<llo_original>
// kernel: tpu_custom_call.1
$region0: #{tpu_custom_call.1}
  #allocation0 [shape = 'u32[]', space=smem, size = 0x4, offset = 0x4, fixed_abs, tag = 'smem constant byte address 0x4 - core index']
  #allocation1 [shape = 'u32[72,128]{1,0:T(1,128)}', space=vmem, size = 0x9000, scoped, tag = 'internal scratch']
  %s0 = inlined_call_operand.vmem [shape: f32[2,4,256], index: 0, kind: input, shape index: {}]
  %s1 = inlined_call_operand.vmem [shape: f32[2,4,256], index: 1, kind: input, shape index: {}]
  %s2 = inlined_call_operand.vmem [shape: f32[2,3,256], index: 2, kind: input, shape index: {}]
  %s3 = inlined_call_operand.hbm [shape: f32[2,2,256], index: 3, kind: input, shape index: {}]
  %s4 = inlined_call_operand.vmem [shape: f32[4,13], index: 4, kind: input, shape index: {}]
  %s5 = inlined_call_operand.vmem [shape: f32[2,4,1], index: 5, kind: input, shape index: {}]
  %s6 = inlined_call_operand.hbm [shape: f32[2,4,256], index: 6, kind: output, shape index: {}]
  %s7 = sld [smem:[#allocation0]]
  $region61: #{tpu_custom_call.1} parent=0
    _
  %s9 = ssub.s32 1, %s7
  %s10 = scalar_select 0, %s9, %s7
  $region1: #{tpu_custom_call.1} parent=0
    #allocation2 [shape = 'u8[4096]{0}', space=vmem, size = 0x1000, scoped, tag = 'input window, operand 3']
    #allocation3 [shape = 's32[2]{0}', space=sflag, size = 0x8, scoped, tag = 'scoped memory for tpu_custom_call.1']
    #allocation4 [shape = 's32[2]{0}', space=sflag, size = 0x8, scoped, tag = 'scoped memory for tpu_custom_call.1']
    #allocation5 [shape = 'u8[8192]{0}', space=vmem, size = 0x2000, scoped, tag = 'output window, operand 0']
    %11 = vsyncpa [#allocation3], 0
    %s12 = scalar_lea.sflag [#allocation3], 1
    %13 = vsyncpa %s12, 0
    %14 = vsyncpa [#allocation4], 0
    %s15 = scalar_lea.sflag [#allocation4], 1
    %16 = vsyncpa %s15, 0
    loop: start=0, step=1, limit=4
    $region2: #{tpu_custom_call.1} parent=1 // loop_pre_header
      _
    $region3: #{tpu_custom_call.1} parent=1 // loop_header
      %s18 = sphi 0, %s22
      %p19 = scmp.ge.s32.totalorder %s18, 4
      %s25 = sphi 0, %s37
      %s26 = sphi 0, %s33
      %s27 = sphi 0, %s25
      %s28 = sphi 0, %s26
      %s29 = sphi 0, %s27
      %s30 = sphi 0, %s28
      %s42 = sphi 0, %s44
      %s45 = sphi 0, %s42
      %s46 = sphi 0, %s45
      %s62 = sphi 0, %s46
      %s70 = sphi 0, %s72
      %s73 = sphi 0, %s70
      %s74 = sphi 0, %s73
      %s90 = sphi 0, %s74
      %s98 = sphi 0, %s100
      %s101 = sphi 0, %s98
      %s102 = sphi 0, %s101
      %s118 = sphi 0, %s102
      %s126 = sphi 0, %s128
      %s129 = sphi 0, %s126
      %s130 = sphi 0, %s129
      %s146 = sphi 0, %s130
      %s150 = sphi 0, %s150
      %s152 = sphi 0, %s150
      %s153 = sphi 0, %s152
      %s167 = sphi 0, %s153
      %s173 = sphi 0, %s175
      %s176 = sphi 0, %s173
      %s177 = sphi 0, %s176
      %s193 = sphi 0, %s177
      %s201 = sphi 0, %s203
      %s204 = sphi 0, %s201
      %s205 = sphi 0, %s204
      %s221 = sphi 0, %s205
    $region4: #{tpu_custom_call.1} parent=1 // loop_header_branch
      %21 = sbr.rel (%p19) target = $region8
    $region5: #{tpu_custom_call.1} parent=1 // loop_body
      %s23 = ssub.s32 %s18, 1
      %s24 = ssub.s32 %s18, 2
      %s31 = sadd.s32 1, %s26
      %p32 = scmp.ge.s32.totalorder %s31, 1
      %s33 = scalar_select %p32, 0, %s31
      %s34 = sadd.s32 1, %s25
      %s35 = scalar_select %p32, %s34, %s25
      %p36 = scmp.ge.s32.totalorder %s35, 2
      %s37 = scalar_select %p36, 0, %s35
      %s38 = ssub.s32 %s25, %s37
      %s39 = ssub.s32 %s26, %s33
      %s40 = sor.u32 %s38, %s39
      %p41 = scmp.eq.s32.totalorder %s40, 0
      %s43 = sadd.s32 %s42, 1
      %s44 = scalar_select %p41, %s42, %s43
      %p47 = pneg %p41
      %p48 = scmp.eq.s32.totalorder %s18, 1
      %p49 = por %p47, %p48
      %p50 = scmp.ne.s32.totalorder %s42, %s45
      %p51 = scmp.eq.s32.totalorder %s18, 0
      %p52 = por %p50, %p51
      %p53 = scmp.ne.s32.totalorder %s42, %s45
      %p54 = scmp.eq.s32.totalorder %s23, 1
      %p55 = por %p53, %p54
      %p56 = scmp.ne.s32.totalorder %s45, %s46
      %p57 = scmp.eq.s32.totalorder %s23, 0
      %p58 = por %p56, %p57
      %p59 = scmp.ne.s32.totalorder %s45, %s46
      %p60 = scmp.eq.s32.totalorder %s24, 1
      %p61 = por %p59, %p60
      %p63 = scmp.ne.s32.totalorder %s46, %s62
      %p64 = scmp.eq.s32.totalorder %s24, 0
      %p65 = por %p63, %p64
      %s66 = ssub.s32 %s25, %s37
      %s67 = ssub.s32 %s26, %s33
      %s68 = sor.u32 %s66, %s67
      %p69 = scmp.eq.s32.totalorder %s68, 0
      %s71 = sadd.s32 %s70, 1
      %s72 = scalar_select %p69, %s70, %s71
      %p75 = pneg %p69
      %p76 = scmp.eq.s32.totalorder %s18, 1
      %p77 = por %p75, %p76
      %p78 = scmp.ne.s32.totalorder %s70, %s73
      %p79 = scmp.eq.s32.totalorder %s18, 0
      %p80 = por %p78, %p79
      %p81 = scmp.ne.s32.totalorder %s70, %s73
      %p82 = scmp.eq.s32.totalorder %s23, 1
      %p83 = por %p81, %p82
      %p84 = scmp.ne.s32.totalorder %s73, %s74
      %p85 = scmp.eq.s32.totalorder %s23, 0
      %p86 = por %p84, %p85
      %p87 = scmp.ne.s32.totalorder %s73, %s74
      %p88 = scmp.eq.s32.totalorder %s24, 1
      %p89 = por %p87, %p88
      %p91 = scmp.ne.s32.totalorder %s74, %s90
      %p92 = scmp.eq.s32.totalorder %s24, 0
      %p93 = por %p91, %p92
      %s94 = ssub.s32 %s25, %s37
      %s95 = ssub.s32 %s26, %s33
      %s96 = sor.u32 %s94, %s95
      %p97 = scmp.eq.s32.totalorder %s96, 0
      %s99 = sadd.s32 %s98, 1
      %s100 = scalar_select %p97, %s98, %s99
      %p103 = pneg %p97
      %p104 = scmp.eq.s32.totalorder %s18, 1
      %p105 = por %p103, %p104
      %p106 = scmp.ne.s32.totalorder %s98, %s101
      %p107 = scmp.eq.s32.totalorder %s18, 0
      %p108 = por %p106, %p107
      %p109 = scmp.ne.s32.totalorder %s98, %s101
      %p110 = scmp.eq.s32.totalorder %s23, 1
      %p111 = por %p109, %p110
      %p112 = scmp.ne.s32.totalorder %s101, %s102
      %p113 = scmp.eq.s32.totalorder %s23, 0
      %p114 = por %p112, %p113
      %p115 = scmp.ne.s32.totalorder %s101, %s102
      %p116 = scmp.eq.s32.totalorder %s24, 1
      %p117 = por %p115, %p116
      %p119 = scmp.ne.s32.totalorder %s102, %s118
      %p120 = scmp.eq.s32.totalorder %s24, 0
      %p121 = por %p119, %p120
      %s122 = ssub.s32 %s25, %s37
      %s123 = ssub.s32 %s26, %s33
      %s124 = sor.u32 %s122, %s123
      %p125 = scmp.eq.s32.totalorder %s124, 0
      %s127 = sadd.s32 %s126, 1
      %s128 = scalar_select %p125, %s126, %s127
      %p131 = pneg %p125
      %p132 = scmp.eq.s32.totalorder %s18, 1
      %p133 = por %p131, %p132
      %p134 = scmp.ne.s32.totalorder %s126, %s129
      %p135 = scmp.eq.s32.totalorder %s18, 0
      %p136 = por %p134, %p135
      %p137 = scmp.ne.s32.totalorder %s126, %s129
      %p138 = scmp.eq.s32.totalorder %s23, 1
      %p139 = por %p137, %p138
      %p140 = scmp.ne.s32.totalorder %s129, %s130
      %p141 = scmp.eq.s32.totalorder %s23, 0
      %p142 = por %p140, %p141
      %p143 = scmp.ne.s32.totalorder %s129, %s130
      %p144 = scmp.eq.s32.totalorder %s24, 1
      %p145 = por %p143, %p144
      %p147 = scmp.ne.s32.totalorder %s130, %s146
      %p148 = scmp.eq.s32.totalorder %s24, 0
      %p149 = por %p147, %p148
      %s151 = sadd.s32 %s150, 1
      %p154 = scmp.eq.s32.totalorder %s18, 1
      %p155 = scmp.ne.s32.totalorder %s150, %s152
      %p156 = scmp.eq.s32.totalorder %s18, 0
      %p157 = por %p155, %p156
      %p158 = scmp.ne.s32.totalorder %s150, %s152
      %p159 = scmp.eq.s32.totalorder %s23, 1
      %p160 = por %p158, %p159
      %p161 = scmp.ne.s32.totalorder %s152, %s153
      %p162 = scmp.eq.s32.totalorder %s23, 0
      %p163 = por %p161, %p162
      %p164 = scmp.ne.s32.totalorder %s152, %s153
      %p165 = scmp.eq.s32.totalorder %s24, 1
      %p166 = por %p164, %p165
      %p168 = scmp.ne.s32.totalorder %s153, %s167
      %p169 = scmp.eq.s32.totalorder %s24, 0
      %p170 = por %p168, %p169
      %s171 = ssub.s32 %s25, %s37
      %p172 = scmp.eq.s32.totalorder %s171, 0
      %s174 = sadd.s32 %s173, 1
      %s175 = scalar_select %p172, %s173, %s174
      %p178 = pneg %p172
      %p179 = scmp.eq.s32.totalorder %s18, 1
      %p180 = por %p178, %p179
      %p181 = scmp.ne.s32.totalorder %s173, %s176
      %p182 = scmp.eq.s32.totalorder %s18, 0
      %p183 = por %p181, %p182
      %p184 = scmp.ne.s32.totalorder %s173, %s176
      %p185 = scmp.eq.s32.totalorder %s23, 1
      %p186 = por %p184, %p185
      %p187 = scmp.ne.s32.totalorder %s176, %s177
      %p188 = scmp.eq.s32.totalorder %s23, 0
      %p189 = por %p187, %p188
      %p190 = scmp.ne.s32.totalorder %s176, %s177
      %p191 = scmp.eq.s32.totalorder %s24, 1
      %p192 = por %p190, %p191
      %p194 = scmp.ne.s32.totalorder %s177, %s193
      %p195 = scmp.eq.s32.totalorder %s24, 0
      %p196 = por %p194, %p195
      %s197 = ssub.s32 %s25, %s37
      %s198 = ssub.s32 %s26, %s33
      %s199 = sor.u32 %s197, %s198
      %p200 = scmp.eq.s32.totalorder %s199, 0
      %s202 = sadd.s32 %s201, 1
      %s203 = scalar_select %p200, %s201, %s202
      %p206 = pneg %p200
      %p207 = scmp.eq.s32.totalorder %s18, 1
      %p208 = por %p206, %p207
      %p209 = scmp.ne.s32.totalorder %s201, %s204
      %p210 = scmp.eq.s32.totalorder %s18, 0
      %p211 = por %p209, %p210
      %p212 = scmp.ne.s32.totalorder %s201, %s204
      %p213 = scmp.eq.s32.totalorder %s23, 1
      %p214 = por %p212, %p213
      %p215 = scmp.ne.s32.totalorder %s204, %s205
      %p216 = scmp.eq.s32.totalorder %s23, 0
      %p217 = por %p215, %p216
      %p218 = scmp.ne.s32.totalorder %s204, %s205
      %p219 = scmp.eq.s32.totalorder %s24, 1
      %p220 = por %p218, %p219
      %p222 = scmp.ne.s32.totalorder %s205, %s221
      %p223 = scmp.eq.s32.totalorder %s24, 0
      %p224 = por %p222, %p223
      %p225 = scmp.le.s32.totalorder 1, %s18
      %p226 = scmp.lt.s32.totalorder %s18, 3
      %p227 = pnand %p225, %p226
      %p228 = pneg %p227
      // Predicated region
      $region9: #{tpu_custom_call.1} parent=5 // pred_check
        _
      $region10: #{tpu_custom_call.1} parent=5 // pred_check_branch
        %230 = sbr.rel (%p227) target = $region12
      $region11: #{tpu_custom_call.1} parent=5 // pred_region
        %s231 = ssub.s32 %s18, 1
        // Predicated region
        $region13: #{tpu_custom_call.1} parent=11 // pred_check
          %p232 = pneg %p163
        $region14: #{tpu_custom_call.1} parent=11 // pred_check_branch
          %234 = sbr.rel (%p232) target = $region16
        $region15: #{tpu_custom_call.1} parent=11 // pred_region
          _
        $region16: #{tpu_custom_call.1} parent=11 // pred_fallthru
          _
      $region12: #{tpu_custom_call.1} parent=5 // pred_fallthru
        _
      %p235 = scmp.lt.s32.totalorder %s18, 2
      // Predicated region
      $region17: #{tpu_custom_call.1} parent=5 // pred_check
        %p236 = pneg %p235
      $region18: #{tpu_custom_call.1} parent=5 // pred_check_branch
        %238 = sbr.rel (%p236) target = $region20
      $region19: #{tpu_custom_call.1} parent=5 // pred_region
        // Predicated region
        $region21: #{tpu_custom_call.1} parent=19 // pred_check
          %p239 = pneg %p52
        $region22: #{tpu_custom_call.1} parent=19 // pred_check_branch
          %241 = sbr.rel (%p239) target = $region24
        $region23: #{tpu_custom_call.1} parent=19 // pred_region
          %s242 = smul.u32 2, %s26
          %p243 = scmp.lt.s32.totalorder %s25, 1
          %s244 = scalar_select %p243, %s25, 1
          %p245 = scmp.lt.s32.totalorder %s242, 1
          %s246 = scalar_select %p245, %s242, 1
          %s247 = smul.addr %s244, 2
          %s248 = sadd.s32 %s246, %s247
          %s249 = smul.addr %s248, 4
          %s250 = scalar_lea.vmem %s0, %s249
          %s251 = smul.u32 2, %s26
        $region24: #{tpu_custom_call.1} parent=19 // pred_fallthru
          _
        // Predicated region
        $region25: #{tpu_custom_call.1} parent=19 // pred_check
          %p252 = pneg %p80
        $region26: #{tpu_custom_call.1} parent=19 // pred_check_branch
          %254 = sbr.rel (%p252) target = $region28
        $region27: #{tpu_custom_call.1} parent=19 // pred_region
          %s255 = smul.u32 2, %s26
          %p256 = scmp.lt.s32.totalorder %s25, 1
          %s257 = scalar_select %p256, %s25, 1
          %p258 = scmp.lt.s32.totalorder %s255, 1
          %s259 = scalar_select %p258, %s255, 1
          %s260 = smul.addr %s257, 2
          %s261 = sadd.s32 %s259, %s260
          %s262 = smul.addr %s261, 4
          %s263 = scalar_lea.vmem %s1, %s262
          %s264 = smul.u32 2, %s26
        $region28: #{tpu_custom_call.1} parent=19 // pred_fallthru
          _
        // Predicated region
        $region29: #{tpu_custom_call.1} parent=19 // pred_check
          %p265 = pneg %p108
        $region30: #{tpu_custom_call.1} parent=19 // pred_check_branch
          %267 = sbr.rel (%p265) target = $region32
        $region31: #{tpu_custom_call.1} parent=19 // pred_region
          %s268 = smul.u32 2, %s26
          %p269 = scmp.lt.s32.totalorder %s25, 1
          %s270 = scalar_select %p269, %s25, 1
          %p271 = scmp.lt.s32.totalorder %s268, 1
          %s272 = scalar_select %p271, %s268, 1
          %s273 = smul.addr %s270, 2
          %s274 = sadd.s32 %s272, %s273
          %s275 = smul.addr %s274, 4
          %s276 = scalar_lea.vmem %s2, %s275
          %s277 = smul.u32 2, %s26
        $region32: #{tpu_custom_call.1} parent=19 // pred_fallthru
          _
        // Predicated region
        $region33: #{tpu_custom_call.1} parent=19 // pred_check
          %p278 = pneg %p136
        $region34: #{tpu_custom_call.1} parent=19 // pred_check_branch
          %280 = sbr.rel (%p278) target = $region36
        $region35: #{tpu_custom_call.1} parent=19 // pred_region
          %s281 = sand.u32 %s126, 1
          %s282 = scalar_lea.sflag [#allocation3], %s281
          %s283 = sand.u32 %s126, 1
          %s284 = smul.addr %s283, 4
          %s285 = scalar_lea.vmem [#allocation2], %s284
          %s286 = smul.u32 2, %s26
          %288 = vsyncadd %s282, 0
          %s289 = smul.addr %s25, 2
          %s290 = sadd.s32 %s286, %s289
          %s291 = smul.addr %s290, 2
          %s292 = scalar_lea.hbm %s3, %s291
          %s294 = sshll.u32 %s292, 4
          %s295 = int_to_ptr.hbm [resolvable:$true] %s294
          %s296 = sshll.u32 %s285, 4
          %s297 = int_to_ptr.vmem [resolvable:$true] %s296
          %299 = dma.hbm_to_vmem [thread:$0]  %s295, 64, %s297, %s282
        $region36: #{tpu_custom_call.1} parent=19 // pred_fallthru
          _
        // Predicated region
        $region37: #{tpu_custom_call.1} parent=19 // pred_check
          %p300 = pneg %p183
        $region38: #{tpu_custom_call.1} parent=19 // pred_check_branch
          %302 = sbr.rel (%p300) target = $region40
        $region39: #{tpu_custom_call.1} parent=19 // pred_region
          %p303 = scmp.lt.s32.totalorder %s25, 1
          %s304 = scalar_select %p303, %s25, 1
          %s305 = smul.addr %s304, 4
          %s306 = scalar_lea.vmem %s5, %s305
        $region40: #{tpu_custom_call.1} parent=19 // pred_fallthru
          _
      $region20: #{tpu_custom_call.1} parent=5 // pred_fallthru
        _
      %p307 = scmp.le.s32.totalorder 1, %s18
      %p308 = scmp.lt.s32.totalorder %s18, 3
      %p309 = pnand %p307, %p308
      %p310 = pneg %p309
      // Predicated region
      $region41: #{tpu_custom_call.1} parent=5 // pred_check
        _
      $region42: #{tpu_custom_call.1} parent=5 // pred_check_branch
        %312 = sbr.rel (%p309) target = $region44
      $region43: #{tpu_custom_call.1} parent=5 // pred_region
        %s313 = ssub.s32 %s18, 1
        %s314 = sand.u32 %s129, 1
        %s315 = scalar_lea.sflag [#allocation3], %s314
        %s316 = sand.u32 %s129, 1
        %s317 = smul.addr %s316, 4
        %s318 = scalar_lea.vmem [#allocation2], %s317
        // Predicated region
        $region45: #{tpu_custom_call.1} parent=43 // pred_check
          %p319 = pneg %p142
        $region46: #{tpu_custom_call.1} parent=43 // pred_check_branch
          %321 = sbr.rel (%p319) target = $region48
        $region47: #{tpu_custom_call.1} parent=43 // pred_region
          %323 = dma.done %s315, 64
        $region48: #{tpu_custom_call.1} parent=43 // pred_fallthru
          _
        %s324 = smul.u32 2, %s28
        %p325 = scmp.lt.s32.totalorder %s27, 1
        %s326 = scalar_select %p325, %s27, 1
        %p327 = scmp.lt.s32.totalorder %s324, 1
        %s328 = scalar_select %p327, %s324, 1
        %s329 = smul.addr %s326, 2
        %s330 = sadd.s32 %s328, %s329
        %s331 = smul.addr %s330, 4
        %s332 = scalar_lea.vmem %s0, %s331
        %p333 = pneg %p58
        %p334 = pneg %p55
        %s335 = smul.u32 2, %s28
        %p336 = scmp.lt.s32.totalorder %s27, 1
        %s337 = scalar_select %p336, %s27, 1
        %p338 = scmp.lt.s32.totalorder %s335, 1
        %s339 = scalar_select %p338, %s335, 1
        %s340 = smul.addr %s337, 2
        %s341 = sadd.s32 %s339, %s340
        %s342 = smul.addr %s341, 4
        %s343 = scalar_lea.vmem %s1, %s342
        %p344 = pneg %p86
        %p345 = pneg %p83
        %s346 = smul.u32 2, %s28
        %p347 = scmp.lt.s32.totalorder %s27, 1
        %s348 = scalar_select %p347, %s27, 1
        %p349 = scmp.lt.s32.totalorder %s346, 1
        %s350 = scalar_select %p349, %s346, 1
        %s351 = smul.addr %s348, 2
        %s352 = sadd.s32 %s350, %s351
        %s353 = smul.addr %s352, 4
        %s354 = scalar_lea.vmem %s2, %s353
        %p355 = pneg %p114
        %p356 = pneg %p111
        %s357 = sand.u32 %s129, 1
        %s358 = scalar_lea.sflag [#allocation3], %s357
        %s359 = sand.u32 %s129, 1
        %s360 = smul.addr %s359, 4
        %s361 = scalar_lea.vmem [#allocation2], %s360
        %p362 = pneg %p142
        %p363 = pneg %p139
        %p364 = pneg %p163
        %p365 = pneg %p160
        %p366 = scmp.lt.s32.totalorder %s27, 1
        %s367 = scalar_select %p366, %s27, 1
        %s368 = smul.addr %s367, 4
        %s369 = scalar_lea.vmem %s5, %s368
        %p370 = pneg %p189
        %p371 = pneg %p186
        %p372 = pneg %p217
        %p373 = pneg %p214
        %s374 = sand.u32 %s204, 1
        %s375 = scalar_lea.sflag [#allocation4], %s374
        %s376 = sand.u32 %s204, 1
        %s377 = smul.addr %s376, 8
        %s378 = scalar_lea.vmem [#allocation5], %s377
        %s379 = smul.u32 2, %s28
        %p380 = scmp.lt.s32.totalorder %s27, 1
        %s381 = scalar_select %p380, %s27, 1
        %p382 = scmp.lt.s32.totalorder %s379, 1
        %s383 = scalar_select %p382, %s379, 1
        %s384 = smul.addr %s381, 2
        %s385 = sadd.s32 %s383, %s384
        %s386 = smul.addr %s385, 4
        %s387 = scalar_lea.vmem %s0, %s386
        %s388 = smul.u32 2, %s28
        %s389 = smul.u32 2, %s28
        %p390 = scmp.lt.s32.totalorder %s27, 1
        %s391 = scalar_select %p390, %s27, 1
        %p392 = scmp.lt.s32.totalorder %s389, 1
        %s393 = scalar_select %p392, %s389, 1
        %s394 = smul.addr %s391, 2
        %s395 = sadd.s32 %s393, %s394
        %s396 = smul.addr %s395, 4
        %s397 = scalar_lea.vmem %s1, %s396
        %s398 = smul.u32 2, %s28
        %s399 = smul.u32 2, %s28
        %p400 = scmp.lt.s32.totalorder %s27, 1
        %s401 = scalar_select %p400, %s27, 1
        %p402 = scmp.lt.s32.totalorder %s399, 1
        %s403 = scalar_select %p402, %s399, 1
        %s404 = smul.addr %s401, 2
        %s405 = sadd.s32 %s403, %s404
        %s406 = smul.addr %s405, 4
        %s407 = scalar_lea.vmem %s2, %s406
        %s408 = smul.u32 2, %s28
        %s409 = smul.u32 2, %s28
        %p410 = scmp.lt.s32.totalorder %s27, 1
        %s411 = scalar_select %p410, %s27, 1
        %s412 = smul.addr %s411, 4
        %s413 = scalar_lea.vmem %s5, %s412
        %s414 = smul.u32 2, %s28
        %v415 = vld [vmem:[%s4] sm:$0xf]
        %v416 = vld [vmem:[%s413] sm:$0xf]
        %v417 = vld [vmem:[%s387] sm:$0xff]
        %419 = vset.pattern.permute.xlu0 0
        %420 = vperm.xlu0 %419, %v415
        %v421 = vpop.permute.xlu0 %420
        %v424 = vperm.slane %v417, 0
        %v425 = vperm.slane %v417, 4
        %v428 = vperm.slane %v424, 0
        %v429 = vperm.slane %v425, 0
        %v430 = vmul.f32 %v421, %v428
        %v431 = vmul.f32 %v421, %v429
        %433 = vset.pattern.permute.xlu0 0
        %434 = vperm.xlu0 %433, %v416
        %v435 = vpop.permute.xlu0 %434
        %v437 = vadd.f32 %v435, %v430
        %v438 = vadd.f32 %v435, %v431
        %439 = vset.pattern.permute.xlu0 1
        %440 = vperm.xlu0 %439, %v415
        %v441 = vpop.permute.xlu0 %440
        %v443 = vperm.slane %v417, 1
        %v444 = vperm.slane %v417, 5
        %v447 = vperm.slane %v443, 1
        %v448 = vperm.slane %v444, 1
        %v449 = vmul.f32 %v441, %v447
        %v450 = vmul.f32 %v441, %v448
        %v451 = vadd.f32 %v437, %v449
        %v452 = vadd.f32 %v438, %v450
        %453 = vset.pattern.permute.xlu0 2
        %454 = vperm.xlu0 %453, %v415
        %v455 = vpop.permute.xlu0 %454
        %v457 = vperm.slane %v417, 2
        %v458 = vperm.slane %v417, 6
        %v461 = vperm.slane %v457, 2
        %v462 = vperm.slane %v458, 2
        %v463 = vmul.f32 %v455, %v461
        %v464 = vmul.f32 %v455, %v462
        %v465 = vadd.f32 %v451, %v463
        %v466 = vadd.f32 %v452, %v464
        %467 = vset.pattern.permute.xlu0 3
        %468 = vperm.xlu0 %467, %v415
        %v469 = vpop.permute.xlu0 %468
        %v471 = vperm.slane %v417, 3
        %v472 = vperm.slane %v417, 7
        %v475 = vperm.slane %v471, 3
        %v476 = vperm.slane %v472, 3
        %v477 = vmul.f32 %v469, %v475
        %v478 = vmul.f32 %v469, %v476
        %v479 = vadd.f32 %v465, %v477
        %v480 = vadd.f32 %v466, %v478
        %v481 = vld [vmem:[%s397] sm:$0xff]
        %482 = vset.pattern.permute.xlu0 4
        %483 = vperm.xlu0 %482, %v415
        %v484 = vpop.permute.xlu0 %483
        %v487 = vperm.slane %v481, 0
        %v488 = vperm.slane %v481, 4
        %v491 = vperm.slane %v487, 0
        %v492 = vperm.slane %v488, 0
        %v493 = vmul.f32 %v484, %v491
        %v494 = vmul.f32 %v484, %v492
        %v495 = vadd.f32 %v479, %v493
        %v496 = vadd.f32 %v480, %v494
        %497 = vset.pattern.permute.xlu0 5
        %498 = vperm.xlu0 %497, %v415
        %v499 = vpop.permute.xlu0 %498
        %v501 = vperm.slane %v481, 1
        %v502 = vperm.slane %v481, 5
        %v505 = vperm.slane %v501, 1
        %v506 = vperm.slane %v502, 1
        %v507 = vmul.f32 %v499, %v505
        %v508 = vmul.f32 %v499, %v506
        %v509 = vadd.f32 %v495, %v507
        %v510 = vadd.f32 %v496, %v508
        %511 = vset.pattern.permute.xlu0 6
        %512 = vperm.xlu0 %511, %v415
        %v513 = vpop.permute.xlu0 %512
        %v515 = vperm.slane %v481, 2
        %v516 = vperm.slane %v481, 6
        %v519 = vperm.slane %v515, 2
        %v520 = vperm.slane %v516, 2
        %v521 = vmul.f32 %v513, %v519
        %v522 = vmul.f32 %v513, %v520
        %v523 = vadd.f32 %v509, %v521
        %v524 = vadd.f32 %v510, %v522
        %525 = vset.pattern.permute.xlu0 7
        %526 = vperm.xlu0 %525, %v415
        %v527 = vpop.permute.xlu0 %526
        %v529 = vperm.slane %v481, 3
        %v530 = vperm.slane %v481, 7
        %v533 = vperm.slane %v529, 3
        %v534 = vperm.slane %v530, 3
        %v535 = vmul.f32 %v527, %v533
        %v536 = vmul.f32 %v527, %v534
        %v537 = vadd.f32 %v523, %v535
        %v538 = vadd.f32 %v524, %v536
        %v539 = vld [vmem:[%s407] sm:$0x77]
        %540 = vset.pattern.permute.xlu0 8
        %541 = vperm.xlu0 %540, %v415
        %v542 = vpop.permute.xlu0 %541
        %v545 = vperm.slane %v539, 0
        %v546 = vperm.slane %v539, 4
        %v549 = vperm.slane %v545, 0
        %v550 = vperm.slane %v546, 0
        %v551 = vmul.f32 %v542, %v549
        %v552 = vmul.f32 %v542, %v550
        %v553 = vadd.f32 %v537, %v551
        %v554 = vadd.f32 %v538, %v552
        %555 = vset.pattern.permute.xlu0 9
        %556 = vperm.xlu0 %555, %v415
        %v557 = vpop.permute.xlu0 %556
        %v559 = vperm.slane %v539, 1
        %v560 = vperm.slane %v539, 5
        %v563 = vperm.slane %v559, 1
        %v564 = vperm.slane %v560, 1
        %v565 = vmul.f32 %v557, %v563
        %v566 = vmul.f32 %v557, %v564
        %v567 = vadd.f32 %v553, %v565
        %v568 = vadd.f32 %v554, %v566
        %569 = vset.pattern.permute.xlu0 10
        %570 = vperm.xlu0 %569, %v415
        %v571 = vpop.permute.xlu0 %570
        %v573 = vperm.slane %v539, 2
        %v574 = vperm.slane %v539, 6
        %v577 = vperm.slane %v573, 2
        %v578 = vperm.slane %v574, 2
        %v579 = vmul.f32 %v571, %v577
        %v580 = vmul.f32 %v571, %v578
        %v581 = vadd.f32 %v567, %v579
        %v582 = vadd.f32 %v568, %v580
        %v583 = vld [vmem:[%s318] sm:$0xf]
        %584 = vset.pattern.permute.xlu0 11
        %585 = vperm.xlu0 %584, %v415
        %v586 = vpop.permute.xlu0 %585
        %v589 = vperm.slane %v583, 0
        %v590 = vperm.slane %v583, 2
        %v593 = vperm.slane %v589, 0
        %v594 = vperm.slane %v590, 0
        %v595 = vmul.f32 %v586, %v593
        %v596 = vmul.f32 %v586, %v594
        %v597 = vadd.f32 %v581, %v595
        %v598 = vadd.f32 %v582, %v596
        %599 = vset.pattern.permute.xlu0 12
        %600 = vperm.xlu0 %599, %v415
        %v601 = vpop.permute.xlu0 %600
        %v603 = vperm.slane %v583, 1
        %v604 = vperm.slane %v583, 3
        %v607 = vperm.slane %v603, 1
        %v608 = vperm.slane %v604, 1
        %v609 = vmul.f32 %v601, %v607
        %v610 = vmul.f32 %v601, %v608
        %v611 = vadd.f32 %v597, %v609
        %v612 = vadd.f32 %v598, %v610
        %v615 = vrot.slane %v612, 4
        %vm616 = vcmask 1043456
        %v617 = vsel %vm616, %v611, %v615
        %619 = vst [vmem:[%s378] sm:$0xff] %v617
        %s620 = sand.u32 %s204, 1
        %s621 = scalar_lea.sflag [#allocation4], %s620
        %s622 = sand.u32 %s204, 1
        %s623 = smul.addr %s622, 8
        %s624 = scalar_lea.vmem [#allocation5], %s623
        // Predicated region
        $region49: #{tpu_custom_call.1} parent=43 // pred_check
          %p625 = pneg %p214
        $region50: #{tpu_custom_call.1} parent=43 // pred_check_branch
          %627 = sbr.rel (%p625) target = $region52
        $region51: #{tpu_custom_call.1} parent=43 // pred_region
          %s628 = smul.u32 2, %s28
          %630 = vsyncadd %s621, 0
          %s631 = smul.addr %s27, 2
          %s632 = sadd.s32 %s628, %s631
          %s633 = smul.addr %s632, 4
          %s634 = scalar_lea.hbm %s6, %s633
          %s636 = sshll.u32 %s624, 4
          %s637 = int_to_ptr.vmem [resolvable:$true] %s636
          %s638 = sshll.u32 %s634, 4
          %s639 = int_to_ptr.hbm [resolvable:$true] %s638
          %641 = dma.vmem_to_hbm [thread:$0]  %s637, 128, %s639, %s621
        $region52: #{tpu_custom_call.1} parent=43 // pred_fallthru
          _
      $region44: #{tpu_custom_call.1} parent=5 // pred_fallthru
        _
      %p642 = scmp.le.s32.totalorder 2, %s18
      // Predicated region
      $region53: #{tpu_custom_call.1} parent=5 // pred_check
        %p643 = pneg %p642
      $region54: #{tpu_custom_call.1} parent=5 // pred_check_branch
        %645 = sbr.rel (%p643) target = $region56
      $region55: #{tpu_custom_call.1} parent=5 // pred_region
        %s646 = ssub.s32 %s18, 2
        // Predicated region
        $region57: #{tpu_custom_call.1} parent=55 // pred_check
          %p647 = pneg %p220
        $region58: #{tpu_custom_call.1} parent=55 // pred_check_branch
          %649 = sbr.rel (%p647) target = $region60
        $region59: #{tpu_custom_call.1} parent=55 // pred_region
          %s650 = sand.u32 %s205, 1
          %s651 = scalar_lea.sflag [#allocation4], %s650
          %s652 = sand.u32 %s205, 1
          %s653 = smul.addr %s652, 8
          %s654 = scalar_lea.vmem [#allocation5], %s653
          %656 = dma.done %s651, 128
        $region60: #{tpu_custom_call.1} parent=55 // pred_fallthru
          _
      $region56: #{tpu_custom_call.1} parent=5 // pred_fallthru
        _
    $region6: #{tpu_custom_call.1} parent=1 // loop_footer
      %s22 = sadd.s32 1, %s18
    $region7: #{tpu_custom_call.1} parent=1 // loop_footer_branch
      %17 = sbr.rel target = $region3
    $region8: #{tpu_custom_call.1} parent=1 // loop_exit
      _
    %657 = vsyncpa [#allocation3], 1
    %s658 = scalar_lea.sflag [#allocation3], 1
    %659 = vsyncpa %s658, 1
    %660 = vsyncpa [#allocation4], 1
    %s661 = scalar_lea.sflag [#allocation4], 1
    %662 = vsyncpa %s661, 1

</llo_original>
